<compile_context>
chip_gen: v7x
topology: tpu7x:2x2x1
jax: 0.10.0
libtpu: 0.0.40
codegen_flags: <defaults>
</compile_context>

<pallas_src>
import functools

import jax
import jax.numpy as jnp
import numpy as np
from jax.experimental import pallas as pl
from jax.experimental.pallas import tpu as pltpu


def _avg_pool_kernel(x_ref, m_ref, o_ref, *, inv_area):
    # x_ref: (tile_r, s*W)   m_ref: (s*W, Wout)   o_ref: (tile_r, Wout)
    x = x_ref[...].astype(jnp.float32)
    acc = jnp.dot(x, m_ref[...], preferred_element_type=jnp.float32)
    o_ref[...] = (acc * inv_area).astype(o_ref.dtype)


def average_pooling(x, scale_factor=2, *, max_rows_per_block=512):
    """Pallas TPU equivalent of F.avg_pool2d(x, scale_factor, scale_factor, 0)."""
    if x.ndim != 4:
        raise ValueError(f"expected NCHW input, got shape {x.shape}")
    s = int(scale_factor)
    N, C, H, W = x.shape
    h_out, w_out = H // s, W // s
    if h_out == 0 or w_out == 0:
        raise ValueError("spatial dims smaller than scale_factor")

    # avg_pool2d with padding=0 / ceil_mode=False drops trailing rows/cols.
    if H != h_out * s:
        x = x[:, :, : h_out * s, :]

    # Row-major (free) reshape: row r = (n, c, i) holds input rows
    # [i*s, i*s + s) concatenated along the last axis -> length s*W.
    rows = N * C * h_out
    x2d = x.reshape(rows, s * W)

    # Constant 0/1 pooling matrix: column j sums the s*s window elements of
    # output column j. Trailing (W % s) input columns map to all-zero rows,
    # implementing the padding=0 truncation along W.
    k_idx = np.arange(s * W)
    m = ((k_idx % W)[:, None] // s == np.arange(w_out)[None, :]).astype(np.float32)
    m = jnp.asarray(m)

    # Tile rows: full extent if small, else a large multiple-of-8 tile so the
    # pipeline has few steps (per-step overhead dominates tiny tiles).
    tile_r = rows if rows <= max_rows_per_block else max_rows_per_block
    grid = (pl.cdiv(rows, tile_r),)

    kernel = functools.partial(_avg_pool_kernel, inv_area=1.0 / float(s * s))

    out2d = pl.pallas_call(
        kernel,
        out_shape=jax.ShapeDtypeStruct((rows, w_out), x.dtype),
        grid_spec=pltpu.PrefetchScalarGridSpec(
            num_scalar_prefetch=0,
            grid=grid,
            in_specs=[
                pl.BlockSpec((tile_r, s * W), lambda i: (i, 0)),  # activations
                pl.BlockSpec((s * W, w_out), lambda i: (0, 0)),   # pooling matrix
            ],
            out_specs=pl.BlockSpec((tile_r, w_out), lambda i: (i, 0)),
        ),
        compiler_params=pltpu.CompilerParams(
            dimension_semantics=("parallel",),
        ),
    )(x2d, m)

    return out2d.reshape(N, C, h_out, w_out)


def average_pooling_reference(x, scale_factor=2):
    """Pure-JAX reference of the PyTorch AveragePoolingLayer forward."""
    s = int(scale_factor)
    N, C, H, W = x.shape
    h_out, w_out = H // s, W // s
    xt = x[:, :, : h_out * s, : w_out * s].reshape(N, C, h_out, s, w_out, s)
    return xt.mean(axis=(3, 5))


if __name__ == "__main__":
    key = jax.random.PRNGKey(0)
    x = jax.random.normal(key, (2, 4, 16, 16), dtype=jnp.float32)

    out = average_pooling(x, scale_factor=2)
    out = jax.block_until_ready(out)

    ref = average_pooling_reference(x, scale_factor=2)
    assert out.shape == (2, 4, 8, 8), out.shape
    np.testing.assert_allclose(np.asarray(out), np.asarray(ref), rtol=1e-4, atol=1e-4)

    print("KERNEL_OK")
</pallas_src>

<mosaic_0001>
module attributes {stable_mosaic.version = 11 : i64} {
  func.func @_avg_pool_kernel(%arg0: i32, %arg1: memref<64x32xf32, #tpu.memory_space<vmem>>, %arg2: memref<32x8xf32, #tpu.memory_space<vmem>>, %arg3: memref<64x8xf32, #tpu.memory_space<vmem>>) attributes {dimension_semantics = [#tpu.dimension_semantics<parallel>], iteration_bounds = array<i64: 1>, scalar_prefetch = 0 : i64, scratch_operands = 0 : i64, tpu.core_type = #tpu.core_type<tc>, window_params = [{transform_indices = @transform_0, window_bounds = array<i64: 64, 32>}, {pipeline_mode = #tpu.pipeline_mode<synchronous>, transform_indices = @transform_1, window_bounds = array<i64: 32, 8>}, {transform_indices = @transform_2, window_bounds = array<i64: 64, 8>}]} {
    %c0 = arith.constant 0 : index
    %c0_0 = arith.constant 0 : index
    %0 = vector.load %arg1[%c0, %c0_0] : memref<64x32xf32, #tpu.memory_space<vmem>>, vector<64x32xf32>
    %c0_1 = arith.constant 0 : index
    %c0_2 = arith.constant 0 : index
    %1 = vector.load %arg2[%c0_1, %c0_2] : memref<32x8xf32, #tpu.memory_space<vmem>>, vector<32x8xf32>
    %cst = arith.constant dense<0.000000e+00> : vector<64x8xf32>
    %2 = tpu.matmul %0, %1, %cst {dimension_numbers = #tpu.dot_dimension_numbers<[1], [0], [0], [1], [0, 0, 1, 1], [], []>} : vector<64x32xf32>, vector<32x8xf32>, vector<64x8xf32> -> vector<64x8xf32>
    %cst_3 = arith.constant 2.500000e-01 : f32
    %3 = vector.broadcast %cst_3 : f32 to vector<64x8xf32>
    %4 = arith.mulf %2, %3 : vector<64x8xf32>
    %c0_4 = arith.constant 0 : index
    %c0_5 = arith.constant 0 : index
    %5 = vector.load %arg3[%c0_4, %c0_5] : memref<64x8xf32, #tpu.memory_space<vmem>>, vector<64x8xf32>
    tpu.vector_store %arg3[%c0_4, %c0_5], %4 {strides = array<i32>} : memref<64x8xf32, #tpu.memory_space<vmem>>, vector<64x8xf32>,
    return
  }
  func.func @transform_0(%arg0: i32) -> (i32, i32) {
    %c0_i32 = arith.constant 0 : i32
    %c0_i32_0 = arith.constant 0 : i32
    return %arg0, %c0_i32 : i32, i32
  }
  func.func @transform_1(%arg0: i32) -> (i32, i32) {
    %c0_i32 = arith.constant 0 : i32
    %c0_i32_0 = arith.constant 0 : i32
    %c0_i32_1 = arith.constant 0 : i32
    return %c0_i32, %c0_i32_0 : i32, i32
  }
  func.func @transform_2(%arg0: i32) -> (i32, i32) {
    %c0_i32 = arith.constant 0 : i32
    %c0_i32_0 = arith.constant 0 : i32
    return %arg0, %c0_i32 : i32, i32
  }
}

</mosaic_0001>

<llo_original>
// kernel: tpu_custom_call.1
$region0: #{tpu_custom_call.1}
  #allocation0 [shape = 'u32[]', space=smem, size = 0x4, offset = 0x4, fixed_abs, tag = 'smem constant byte address 0x4 - core index']
  #allocation1 [shape = 'u32[144,128]{1,0:T(1,128)}', space=vmem, size = 0x12000, scoped, tag = 'internal scratch']
  %s0 = inlined_call_operand.vmem [shape: f32[64,32], index: 0, kind: input, shape index: {}]
  %s1 = inlined_call_operand.vmem [shape: f32[32,8], index: 1, kind: input, shape index: {}]
  %s2 = inlined_call_operand.vmem [shape: f32[64,8], index: 2, kind: output, shape index: {}]
  %s3 = sld [smem:[#allocation0]]
  $region18: #{tpu_custom_call.1} parent=0
    _
  %s5 = ssub.s32 1, %s3
  %s6 = scalar_select 0, %s5, %s3
  // Predicated region
  $region2: #{tpu_custom_call.1} parent=0 // pred_check
    _
  $region3: #{tpu_custom_call.1} parent=0 // pred_check_branch
    %8 = sbr.rel (0) target = $region5
  $region4: #{tpu_custom_call.1} parent=0 // pred_region
    _
  $region5: #{tpu_custom_call.1} parent=0 // pred_fallthru
    _
  // Predicated region
  $region6: #{tpu_custom_call.1} parent=0 // pred_check
    _
  $region7: #{tpu_custom_call.1} parent=0 // pred_check_branch
    %10 = sbr.rel (0) target = $region9
  $region8: #{tpu_custom_call.1} parent=0 // pred_region
    _
  $region9: #{tpu_custom_call.1} parent=0 // pred_fallthru
    _
  %v11 = vld [vmem:[%s0] sm:$0xff]
  %v12 = vld [vmem:[%s0 + $0x8] sm:$0xff]
  %v13 = vld [vmem:[%s0 + $0x10] sm:$0xff]
  %v14 = vld [vmem:[%s0 + $0x18] sm:$0xff]
  %v15 = vld [vmem:[%s0 + $0x20] sm:$0xff]
  %v16 = vld [vmem:[%s0 + $0x28] sm:$0xff]
  %v17 = vld [vmem:[%s0 + $0x30] sm:$0xff]
  %v18 = vld [vmem:[%s0 + $0x38] sm:$0xff]
  %v19 = vld [vmem:[%s1] sm:$0xff]
  %v20 = vld [vmem:[%s1 + $0x8] sm:$0xff]
  %v21 = vld [vmem:[%s1 + $0x10] sm:$0xff]
  %v22 = vld [vmem:[%s1 + $0x18] sm:$0xff]
  %vm23 = vcmask 261120
  %v25 = vsel %vm23, %v11, 0
  %v28 = vsel %vm23, %v12, 0
  %v31 = vsel %vm23, %v13, 0
  %v34 = vsel %vm23, %v14, 0
  %v37 = vsel %vm23, %v15, 0
  %v40 = vsel %vm23, %v16, 0
  %v43 = vsel %vm23, %v17, 0
  %v46 = vsel %vm23, %v18, 0
  %48 = vmatprep.subr.mxu0 0.0
  %49 = vmatpush1.msra.mxu0 %v19
  %50 = vmatprep.subr.mxu0 0.0
  %51 = vmatpush1.msra.mxu0 %v20
  %52 = vmatprep.subr.mxu0 0.0
  %53 = vmatpush1.msra.mxu0 %v21
  %54 = vmatprep.subr.mxu0 0.0
  %55 = vmatpush1.msra.mxu0 %v22
  %56 = vmatprep.subr.mxu0 0.0
  %57 = vmatpush1.msra.mxu0 0.0
  %58 = vmatprep.subr.mxu0 0.0
  %59 = vmatpush1.msra.mxu0 0.0
  %60 = vmatprep.subr.mxu0 0.0
  %61 = vmatpush1.msra.mxu0 0.0
  %62 = vmatprep.subr.mxu0 0.0
  %63 = vmatpush1.msra.mxu0 0.0
  %64 = vmatprep.subr.mxu0 0.0
  %65 = vmatpush1.msra.mxu0 0.0
  %66 = vmatprep.subr.mxu0 0.0
  %67 = vmatpush1.msra.mxu0 0.0
  %68 = vmatprep.subr.mxu0 0.0
  %69 = vmatpush1.msra.mxu0 0.0
  %70 = vmatprep.subr.mxu0 0.0
  %71 = vmatpush1.msra.mxu0 0.0
  %72 = vmatprep.subr.mxu0 0.0
  %73 = vmatpush1.msra.mxu0 0.0
  %74 = vmatprep.subr.mxu0 0.0
  %75 = vmatpush1.msra.mxu0 0.0
  %76 = vmatprep.subr.mxu0 0.0
  %77 = vmatpush1.msra.mxu0 0.0
  %78 = vmatprep.subr.mxu0 0.0
  %79 = vmatpush1.msra.mxu0 0.0
  %80 = vmatprep.subr.mxu0 0.0
  %81 = vmatpush1.msra.mxu0 0.0
  %82 = vmatprep.subr.mxu0 0.0
  %83 = vmatpush1.msra.mxu0 0.0
  %84 = vmatprep.subr.mxu0 0.0
  %85 = vmatpush1.msra.mxu0 0.0
  %86 = vmatprep.subr.mxu0 0.0
  %87 = vmatpush1.msra.mxu0 0.0
  %88 = vmatprep.subr.mxu0 0.0
  %89 = vmatpush1.msra.mxu0 0.0
  %90 = vmatprep.subr.mxu0 0.0
  %91 = vmatpush1.msra.mxu0 0.0
  %92 = vmatprep.subr.mxu0 0.0
  %93 = vmatpush1.msra.mxu0 0.0
  %94 = vmatprep.subr.mxu0 0.0
  %95 = vmatpush1.msra.mxu0 0.0
  %96 = vmatprep.subr.mxu0 0.0
  %97 = vmatpush1.msra.mxu0 0.0
  %98 = vmatprep.subr.mxu0 0.0
  %99 = vmatpush1.msra.mxu0 0.0
  %100 = vmatprep.subr.mxu0 0.0
  %101 = vmatpush1.msra.mxu0 0.0
  %102 = vmatprep.subr.mxu0 0.0
  %103 = vmatpush1.msra.mxu0 0.0
  %104 = vmatprep.subr.mxu0 0.0
  %105 = vmatpush1.msra.mxu0 0.0
  %106 = vmatprep.subr.mxu0 0.0
  %107 = vmatpush1.msra.mxu0 0.0
  %108 = vmatprep.subr.mxu0 0.0
  %109 = vmatpush1.msra.mxu0 0.0
  %110 = vmatprep.subr.mxu0 0.0
  %111 = vmatpush1.msra.mxu0 0.0
  %112 = vmatprep.mubr.f32.mxu0 0.0
  %113 = vmatmul.mubr.f32.gmra.mrb[0].mxu0 %v25
  %v114 = vpop.f32.mrb[0].mxu0
  %v115 = vadd.f32 0.0, %v114
  %v116 = vpop.f32.mrb[0].mxu0
  %117 = vmatprep.mubr.f32.mxu0 0.0
  %118 = vmatmul.mubr.f32.gmra.mrb[0].mxu0 %v28
  %v119 = vpop.f32.mrb[0].mxu0
  %v120 = vadd.f32 0.0, %v119
  %v121 = vpop.f32.mrb[0].mxu0
  %122 = vmatprep.mubr.f32.mxu0 0.0
  %123 = vmatmul.mubr.f32.gmra.mrb[0].mxu0 %v31
  %v124 = vpop.f32.mrb[0].mxu0
  %v125 = vadd.f32 0.0, %v124
  %v126 = vpop.f32.mrb[0].mxu0
  %127 = vmatprep.mubr.f32.mxu0 0.0
  %128 = vmatmul.mubr.f32.gmra.mrb[0].mxu0 %v34
  %v129 = vpop.f32.mrb[0].mxu0
  %v130 = vadd.f32 0.0, %v129
  %v131 = vpop.f32.mrb[0].mxu0
  %132 = vmatprep.mubr.f32.mxu0 0.0
  %133 = vmatmul.mubr.f32.gmra.mrb[0].mxu0 %v37
  %v134 = vpop.f32.mrb[0].mxu0
  %v135 = vadd.f32 0.0, %v134
  %v136 = vpop.f32.mrb[0].mxu0
  %137 = vmatprep.mubr.f32.mxu0 0.0
  %138 = vmatmul.mubr.f32.gmra.mrb[0].mxu0 %v40
  %v139 = vpop.f32.mrb[0].mxu0
  %v140 = vadd.f32 0.0, %v139
  %v141 = vpop.f32.mrb[0].mxu0
  %142 = vmatprep.mubr.f32.mxu0 0.0
  %143 = vmatmul.mubr.f32.gmra.mrb[0].mxu0 %v43
  %v144 = vpop.f32.mrb[0].mxu0
  %v145 = vadd.f32 0.0, %v144
  %v146 = vpop.f32.mrb[0].mxu0
  %147 = vmatprep.mubr.f32.mxu0 0.0
  %148 = vmatmul.mubr.f32.gmra.mrb[0].mxu0 %v46
  %v149 = vpop.f32.mrb[0].mxu0
  %v150 = vadd.f32 0.0, %v149
  %v151 = vpop.f32.mrb[0].mxu0
  %152 = vdwg.mxu0
  %v153 = vmul.f32 %v115, 0.25
  %v154 = vmul.f32 %v120, 0.25
  %v155 = vmul.f32 %v125, 0.25
  %v156 = vmul.f32 %v130, 0.25
  %v157 = vmul.f32 %v135, 0.25
  %v158 = vmul.f32 %v140, 0.25
  %v159 = vmul.f32 %v145, 0.25
  %v160 = vmul.f32 %v150, 0.25
  %vm161 = vcmask 64512
  %162 = vst.msk [vmem:[%s2] sm:$0xff] %vm161, %v153
  %163 = vst.msk [vmem:[%s2 + $0x8] sm:$0xff] %vm161, %v154
  %164 = vst.msk [vmem:[%s2 + $0x10] sm:$0xff] %vm161, %v155
  %165 = vst.msk [vmem:[%s2 + $0x18] sm:$0xff] %vm161, %v156
  %166 = vst.msk [vmem:[%s2 + $0x20] sm:$0xff] %vm161, %v157
  %167 = vst.msk [vmem:[%s2 + $0x28] sm:$0xff] %vm161, %v158
  %168 = vst.msk [vmem:[%s2 + $0x30] sm:$0xff] %vm161, %v159
  %169 = vst.msk [vmem:[%s2 + $0x38] sm:$0xff] %vm161, %v160
  // Predicated region
  $region10: #{tpu_custom_call.1} parent=0 // pred_check
    _
  $region11: #{tpu_custom_call.1} parent=0 // pred_check_branch
    %171 = sbr.rel (0) target = $region13
  $region12: #{tpu_custom_call.1} parent=0 // pred_region
    _
  $region13: #{tpu_custom_call.1} parent=0 // pred_fallthru
    _
  // Predicated region
  $region14: #{tpu_custom_call.1} parent=0 // pred_check
    _
  $region15: #{tpu_custom_call.1} parent=0 // pred_check_branch
    %173 = sbr.rel (0) target = $region17
  $region16: #{tpu_custom_call.1} parent=0 // pred_region
    _
  $region17: #{tpu_custom_call.1} parent=0 // pred_fallthru
    _

</llo_original>
